<compile_context>
chip_gen: v6e
topology: v6e:2x2x1
jax: 0.10.0
libtpu: 0.0.40
codegen_flags: <defaults>
</compile_context>

<pallas_src>
import functools

import jax
import jax.numpy as jnp
from jax.experimental import pallas as pl
from jax.experimental.pallas import tpu as pltpu


def _mix32(h):
    """Wellons' lowbias32 finalizer: cheap 32-bit avalanche (2 mul, 3 xor/shr)."""
    h = h ^ (h >> jnp.uint32(16))
    h = h * jnp.uint32(0x7FEB352D)
    h = h ^ (h >> jnp.uint32(15))
    h = h * jnp.uint32(0x846CA68B)
    h = h ^ (h >> jnp.uint32(16))
    return h


def _text_masking_kernel(
    seed_ref,            # scalar-prefetch (SMEM): (1,) int32 seed
    x_ref,               # (TB, TS) int32 token ids
    pad_ref,             # (TB, TS) int8 pad mask (nonzero == pad)
    x_out_ref,           # (TB, TS) int32 masked tokens
    labels_ref,          # (TB, TS) int32 labels (-100 where not selected)
    *,
    block_rows: int,
    block_cols: int,
    seq_len: int,
    vocab_size: int,
    unk_token_id: int,
    mask_token_id: int,
    num_special_tokens: int,
    mask_p: float,
):
    x = x_ref[...]
    pad = pad_ref[...] != 0

    # Global element counter in uint32: identical random pattern for any
    # tiling / core assignment.  Row term is computed on a (TB, 1) column
    # (tiny multiply) and broadcast-added to a (1, TS) lane iota -> no
    # full-tile int32 multiply (VALU relief on v7x).
    row0 = (pl.program_id(0) * block_rows).astype(jnp.uint32)
    col0 = (pl.program_id(1) * block_cols).astype(jnp.uint32)
    rows = jax.lax.broadcasted_iota(jnp.uint32, (block_rows, 1), 0) + row0
    cols = jax.lax.broadcasted_iota(jnp.uint32, (1, block_cols), 1) + col0
    ctr = rows * jnp.uint32(seq_len) + cols

    seed = seed_ref[0].astype(jnp.uint32)
    u = _mix32(ctr ^ (seed * jnp.uint32(0x9E3779B1)))   # single hash stream

    # Nested uint32 thresholds (one uniform drives everything):
    #   u in [0, thr_m2)        -> random replacement token   (0.1 * mask_p)
    #   u in [thr_m2, thr_m1)   -> [MASK]                     (0.8 * mask_p)
    #   u in [thr_m1, thr_sel)  -> selected but unchanged     (0.1 * mask_p)
    two32 = float(1 << 32)
    max_u32 = (1 << 32) - 1
    thr_sel_i = min(int(round(mask_p * two32)), max_u32)
    thr_m1_i = min(int(round(0.9 * mask_p * two32)), max_u32)
    thr_m2_i = min(int(round(0.1 * mask_p * two32)), max_u32)

    is_special = jnp.logical_or(x == jnp.int32(unk_token_id), pad)
    is_input = jnp.logical_not(is_special)

    is_selected = jnp.logical_and(u < jnp.uint32(thr_sel_i), is_input)
    is_sel1 = jnp.logical_and(u < jnp.uint32(thr_m1_i), is_input)   # -> [MASK]
    is_sel2 = jnp.logical_and(u < jnp.uint32(thr_m2_i), is_input)   # -> random

    # Replacement token in [num_special_tokens, vocab_size), derived from the
    # SAME uniform conditioned on u < thr_m2 (rescale): distributionally
    # identical to an independent draw, saves a second hash per element.
    rng = vocab_size - num_special_tokens
    scale = float(rng) / float(max(thr_m2_i, 1))
    rt_f = u.astype(jnp.float32) * jnp.float32(scale)
    rt_f = jnp.minimum(rt_f, jnp.float32(rng - 1))       # guard rounding edge
    rand_tok = jnp.int32(num_special_tokens) + rt_f.astype(jnp.int32)

    x_new = jnp.where(is_sel1, jnp.int32(mask_token_id), x)
    x_new = jnp.where(is_sel2, rand_tok, x_new)

    x_out_ref[...] = x_new
    labels_ref[...] = jnp.where(is_selected, x, jnp.int32(-100))


def _choose_tiles(B: int, S: int):
    """Pick (row_tile, col_tile) targeting ~2 MiB of int32 x per tile while
    keeping >=4 grid steps over B when the batch allows (v7x 2-TC split,
    double-buffering).  Column tiling kicks in only for very long sequences."""
    target_elems = (2 * 1024 * 1024) // 4          # ~2 MiB of int32
    if S <= target_elems // 8:
        ts = S                                      # full seq (block == dim)
    else:
        ts = max(128, ((target_elems // 8) // 128) * 128)
    tb = max(8, ((target_elems // ts) // 8) * 8)
    cap = max(8, ((pl.cdiv(B, 4) + 7) // 8) * 8)    # keep >= ~4 steps over B
    tb = min(tb, cap)
    if tb >= B:
        tb = B                                      # block == full batch dim
    return tb, ts


def text_masking(
    x,
    pad_mask,
    seed: int,
    *,
    vocab_size: int,
    unk_token_id: int,
    mask_token_id: int,
    num_special_tokens: int,
    mask_p: float = 0.15,
):
    """Pallas-TPU TextMasking.forward. Returns (masked_x, labels)."""
    assert x.ndim == 2
    B, S = x.shape
    x = x.astype(jnp.int32)
    pad_i8 = pad_mask.astype(jnp.int8)          # 1 byte/elem input stream
    seed_arr = jnp.asarray([seed], dtype=jnp.int32)

    tb, ts = _choose_tiles(B, S)
    grid = (pl.cdiv(B, tb), pl.cdiv(S, ts))

    kernel = functools.partial(
        _text_masking_kernel,
        block_rows=tb,
        block_cols=ts,
        seq_len=S,
        vocab_size=vocab_size,
        unk_token_id=unk_token_id,
        mask_token_id=mask_token_id,
        num_special_tokens=num_special_tokens,
        mask_p=mask_p,
    )

    grid_spec = pltpu.PrefetchScalarGridSpec(
        num_scalar_prefetch=1,
        grid=grid,
        in_specs=[
            pl.BlockSpec((tb, ts), lambda i, j, seed: (i, j)),
            pl.BlockSpec((tb, ts), lambda i, j, seed: (i, j)),
        ],
        out_specs=[
            pl.BlockSpec((tb, ts), lambda i, j, seed: (i, j)),
            pl.BlockSpec((tb, ts), lambda i, j, seed: (i, j)),
        ],
    )

    return pl.pallas_call(
        kernel,
        out_shape=(
            jax.ShapeDtypeStruct((B, S), jnp.int32),
            jax.ShapeDtypeStruct((B, S), jnp.int32),
        ),
        grid_spec=grid_spec,
        compiler_params=pltpu.CompilerParams(
            dimension_semantics=("parallel", "parallel"),
            vmem_limit_bytes=32 * 1024 * 1024,
        ),
    )(seed_arr, x, pad_i8)


if __name__ == "__main__":
    # Module hyper-parameters (deterministic, set in-script).
    VOCAB_SIZE = 1000
    UNK_TOKEN_ID = 1
    MASK_TOKEN_ID = 4
    NUM_SPECIAL_TOKENS = 5
    MASK_P = 0.15

    # Small input shapes: (batch=8, seq=128) int32 token ids + bool pad mask.
    B, S = 8, 128
    key = jax.random.PRNGKey(0)
    kx, kp = jax.random.split(key)
    x_in = jax.random.randint(kx, (B, S), 0, VOCAB_SIZE, dtype=jnp.int32)
    lengths = jax.random.randint(kp, (B, 1), S // 2, S, dtype=jnp.int32)
    pad_mask = jnp.arange(S, dtype=jnp.int32)[None, :] >= lengths  # True == pad

    x_out, labels = text_masking(
        x_in,
        pad_mask,
        seed=1234,
        vocab_size=VOCAB_SIZE,
        unk_token_id=UNK_TOKEN_ID,
        mask_token_id=MASK_TOKEN_ID,
        num_special_tokens=NUM_SPECIAL_TOKENS,
        mask_p=MASK_P,
    )
    jax.block_until_ready((x_out, labels))

    # Light semantic invariants (mirrors the PyTorch forward contract).
    x_out_np = jax.device_get(x_out)
    labels_np = jax.device_get(labels)
    x_in_np = jax.device_get(x_in)
    pad_np = jax.device_get(pad_mask)

    not_selected = labels_np == -100
    # Labels are either -100 or the original token.
    assert ((labels_np == x_in_np) | not_selected).all()
    # Non-selected positions are untouched in x.
    assert (x_out_np[not_selected] == x_in_np[not_selected]).all()
    # Pad / UNK positions are never selected.
    special = (x_in_np == UNK_TOKEN_ID) | pad_np
    assert not_selected[special].all()
    # Selected-and-changed positions are [MASK] or a token >= num_special_tokens.
    changed = x_out_np != x_in_np
    assert (changed <= ~not_selected).all()
    assert ((x_out_np[changed] == MASK_TOKEN_ID)
            | (x_out_np[changed] >= NUM_SPECIAL_TOKENS)).all()
    # All output tokens are valid vocab ids.
    assert (x_out_np >= 0).all() and (x_out_np < VOCAB_SIZE).all()

    print("KERNEL_OK")
</pallas_src>

<mosaic_0001>
module attributes {stable_mosaic.version = 11 : i64} {
  func.func @_text_masking_kernel(%arg0: i32, %arg1: i32, %arg2: memref<1xi32, #tpu.memory_space<smem>>, %arg3: memref<8x128xi32, #tpu.memory_space<vmem>>, %arg4: memref<8x128xi8, #tpu.memory_space<vmem>>, %arg5: memref<8x128xi32, #tpu.memory_space<vmem>>, %arg6: memref<8x128xi32, #tpu.memory_space<vmem>>) attributes {dimension_semantics = [#tpu.dimension_semantics<parallel>, #tpu.dimension_semantics<parallel>], iteration_bounds = array<i64: 1, 1>, scalar_prefetch = 1 : i64, scratch_operands = 0 : i64, tpu.core_type = #tpu.core_type<tc>, window_params = [{transform_indices = @transform_0, window_bounds = array<i64: 8, 128>}, {transform_indices = @transform_1, window_bounds = array<i64: 8, 128>}, {transform_indices = @transform_2, window_bounds = array<i64: 8, 128>}, {transform_indices = @transform_3, window_bounds = array<i64: 8, 128>}]} {
    %c0 = arith.constant 0 : index
    %c0_0 = arith.constant 0 : index
    %0 = vector.load %arg3[%c0, %c0_0] : memref<8x128xi32, #tpu.memory_space<vmem>>, vector<8x128xi32>
    %c0_1 = arith.constant 0 : index
    %c0_2 = arith.constant 0 : index
    %1 = vector.load %arg4[%c0_1, %c0_2] : memref<8x128xi8, #tpu.memory_space<vmem>>, vector<8x128xi8>
    %c0_i8 = arith.constant 0 : i8
    %2 = vector.broadcast %c0_i8 : i8 to vector<8x128xi8>
    %3 = arith.cmpi ne, %1, %2 : vector<8x128xi8>
    %c8_i32 = arith.constant 8 : i32
    %4 = arith.muli %arg0, %c8_i32 : i32
    %c128_i32 = arith.constant 128 : i32
    %5 = arith.muli %arg1, %c128_i32 : i32
    %6 = tpu.iota {dimensions = array<i32: 0>} : vector<8x1xi32>
    %7 = vector.broadcast %4 : i32 to vector<8x1xi32>
    %8 = arith.addi %6, %7 : vector<8x1xi32>
    %9 = tpu.iota {dimensions = array<i32: 1>} : vector<1x128xi32>
    %10 = vector.broadcast %5 : i32 to vector<1x128xi32>
    %11 = arith.addi %9, %10 : vector<1x128xi32>
    %c128_i32_3 = arith.constant 128 : i32
    %12 = vector.broadcast %c128_i32_3 : i32 to vector<8x1xi32>
    %13 = arith.muli %8, %12 : vector<8x1xi32>
    %14 = vector.broadcast %13 : vector<8x1xi32> to vector<8x128xi32>
    %15 = vector.broadcast %11 : vector<1x128xi32> to vector<8x128xi32>
    %16 = arith.addi %14, %15 : vector<8x128xi32>
    %c0_4 = arith.constant 0 : index
    %17 = memref.load %arg2[%c0_4] : memref<1xi32, #tpu.memory_space<smem>>
    %c-1640531535_i32 = arith.constant -1640531535 : i32
    %18 = arith.muli %17, %c-1640531535_i32 : i32
    %19 = vector.broadcast %18 : i32 to vector<8x128xi32>
    %20 = arith.xori %16, %19 : vector<8x128xi32>
    %c16_i32 = arith.constant 16 : i32
    %21 = vector.broadcast %c16_i32 : i32 to vector<8x128xi32>
    %22 = arith.shrui %20, %21 : vector<8x128xi32>
    %23 = arith.xori %20, %22 : vector<8x128xi32>
    %c2146121005_i32 = arith.constant 2146121005 : i32
    %24 = vector.broadcast %c2146121005_i32 : i32 to vector<8x128xi32>
    %25 = arith.muli %23, %24 : vector<8x128xi32>
    %c15_i32 = arith.constant 15 : i32
    %26 = vector.broadcast %c15_i32 : i32 to vector<8x128xi32>
    %27 = arith.shrui %25, %26 : vector<8x128xi32>
    %28 = arith.xori %25, %27 : vector<8x128xi32>
    %c-2073254261_i32 = arith.constant -2073254261 : i32
    %29 = vector.broadcast %c-2073254261_i32 : i32 to vector<8x128xi32>
    %30 = arith.muli %28, %29 : vector<8x128xi32>
    %c16_i32_5 = arith.constant 16 : i32
    %31 = vector.broadcast %c16_i32_5 : i32 to vector<8x128xi32>
    %32 = arith.shrui %30, %31 : vector<8x128xi32>
    %33 = arith.xori %30, %32 : vector<8x128xi32>
    %c1_i32 = arith.constant 1 : i32
    %34 = vector.broadcast %c1_i32 : i32 to vector<8x128xi32>
    %35 = arith.cmpi eq, %0, %34 : vector<8x128xi32>
    %36 = arith.ori %35, %3 : vector<8x128xi1>
    %cst = arith.constant dense<true> : vector<8x128xi1>
    %37 = arith.xori %36, %cst : vector<8x128xi1>
    %c644245094_i32 = arith.constant 644245094 : i32
    %38 = vector.broadcast %c644245094_i32 : i32 to vector<8x128xi32>
    %39 = arith.cmpi ult, %33, %38 : vector<8x128xi32>
    %40 = arith.andi %39, %37 : vector<8x128xi1>
    %c579820585_i32 = arith.constant 579820585 : i32
    %41 = vector.broadcast %c579820585_i32 : i32 to vector<8x128xi32>
    %42 = arith.cmpi ult, %33, %41 : vector<8x128xi32>
    %43 = arith.andi %42, %37 : vector<8x128xi1>
    %c64424509_i32 = arith.constant 64424509 : i32
    %44 = vector.broadcast %c64424509_i32 : i32 to vector<8x128xi32>
    %45 = arith.cmpi ult, %33, %44 : vector<8x128xi32>
    %46 = arith.andi %45, %37 : vector<8x128xi1>
    %47 = arith.uitofp %33 : vector<8x128xi32> to vector<8x128xf32>
    %cst_6 = arith.constant 1.54444333E-5 : f32
    %48 = vector.broadcast %cst_6 : f32 to vector<8x128xf32>
    %49 = arith.mulf %47, %48 : vector<8x128xf32>
    %cst_7 = arith.constant 9.940000e+02 : f32
    %50 = vector.broadcast %cst_7 : f32 to vector<8x128xf32>
    %51 = arith.minimumf %49, %50 : vector<8x128xf32>
    %52 = arith.fptosi %51 : vector<8x128xf32> to vector<8x128xi32>
    %c5_i32 = arith.constant 5 : i32
    %53 = vector.broadcast %c5_i32 : i32 to vector<8x128xi32>
    %54 = arith.addi %53, %52 : vector<8x128xi32>
    %c4_i32 = arith.constant 4 : i32
    %55 = vector.broadcast %c4_i32 : i32 to vector<8x128xi32>
    %56 = arith.select %43, %55, %0 : vector<8x128xi1>, vector<8x128xi32>
    %57 = arith.select %46, %54, %56 : vector<8x128xi1>, vector<8x128xi32>
    %c0_8 = arith.constant 0 : index
    %c0_9 = arith.constant 0 : index
    %58 = vector.load %arg5[%c0_8, %c0_9] : memref<8x128xi32, #tpu.memory_space<vmem>>, vector<8x128xi32>
    tpu.vector_store %arg5[%c0_8, %c0_9], %57 {strides = array<i32>} : memref<8x128xi32, #tpu.memory_space<vmem>>, vector<8x128xi32>,
    %c-100_i32 = arith.constant -100 : i32
    %59 = vector.broadcast %c-100_i32 : i32 to vector<8x128xi32>
    %60 = arith.select %40, %0, %59 : vector<8x128xi1>, vector<8x128xi32>
    %c0_10 = arith.constant 0 : index
    %c0_11 = arith.constant 0 : index
    %61 = vector.load %arg6[%c0_10, %c0_11] : memref<8x128xi32, #tpu.memory_space<vmem>>, vector<8x128xi32>
    tpu.vector_store %arg6[%c0_10, %c0_11], %60 {strides = array<i32>} : memref<8x128xi32, #tpu.memory_space<vmem>>, vector<8x128xi32>,
    return
  }
  func.func @transform_0(%arg0: i32, %arg1: i32, %arg2: memref<1xi32, #tpu.memory_space<smem>>) -> (i32, i32) {
    %c0_i32 = arith.constant 0 : i32
    return %arg0, %arg1 : i32, i32
  }
  func.func @transform_1(%arg0: i32, %arg1: i32, %arg2: memref<1xi32, #tpu.memory_space<smem>>) -> (i32, i32) {
    %c0_i32 = arith.constant 0 : i32
    return %arg0, %arg1 : i32, i32
  }
  func.func @transform_2(%arg0: i32, %arg1: i32, %arg2: memref<1xi32, #tpu.memory_space<smem>>) -> (i32, i32) {
    %c0_i32 = arith.constant 0 : i32
    return %arg0, %arg1 : i32, i32
  }
  func.func @transform_3(%arg0: i32, %arg1: i32, %arg2: memref<1xi32, #tpu.memory_space<smem>>) -> (i32, i32) {
    %c0_i32 = arith.constant 0 : i32
    return %arg0, %arg1 : i32, i32
  }
}

</mosaic_0001>

<llo_original>
// kernel: tpu_custom_call.1
$region0: #{tpu_custom_call.1}
  #allocation0 [shape = 'u32[]', space=smem, size = 0x4, offset = 0x4, fixed_abs, tag = 'smem constant byte address 0x4 - core index']
  #allocation1 [shape = 'u32[144,128]{1,0:T(1,128)}', space=vmem, size = 0x12000, scoped, tag = 'internal scratch']
  #allocation2 [shape = 's32[1]{0}', space=sflag, size = 0x4, scoped, tag = 'scoped memory for tpu_custom_call.1']
  #allocation3 [shape = 's32[1]{0:T(128)S(6)}', space=smem, size = 0x200, scoped, tag = 'prefetched SMEM operand 0']
  %s0 = inlined_call_operand.<no memory space> [shape: s32[1], index: 0, kind: input, shape index: {}]
  %s1 = inlined_call_operand.hbm [shape: s32[8,128], index: 1, kind: input, shape index: {}]
  %s2 = inlined_call_operand.vmem [shape: s8[8,128], index: 2, kind: input, shape index: {}]
  %s3 = inlined_call_operand.hbm [shape: s32[8,128], index: 3, kind: output, shape index: {0}]
  %s4 = inlined_call_operand.hbm [shape: s32[8,128], index: 4, kind: output, shape index: {1}]
  %5 = xla_tuple %s3, %s4
  %s6 = sld [smem:[#allocation0]]
  $region30: #{tpu_custom_call.1} parent=0
    _
  %s8 = ssub.s32 1, %s6
  %s9 = scalar_select 0, %s8, %s6
  %10 = sst [smem:[#allocation3]] %s0
  $region1: #{tpu_custom_call.1} parent=0
    #allocation4 [shape = 'u8[4096]{0}', space=vmem, size = 0x1000, scoped, tag = 'input window, operand 1, single buffered']
    #allocation5 [shape = 's32[1]{0}', space=sflag, size = 0x4, scoped, tag = 'scoped memory for tpu_custom_call.1']
    #allocation6 [shape = 's32[1]{0}', space=sflag, size = 0x4, scoped, tag = 'scoped memory for tpu_custom_call.1']
    #allocation7 [shape = 'u8[4096]{0}', space=vmem, size = 0x1000, scoped, tag = 'output window, operand 0, single buffered']
    #allocation8 [shape = 'u8[4096]{0}', space=vmem, size = 0x1000, scoped, tag = 'output window, operand 1, single buffered']
    #allocation9 [shape = 's32[1]{0}', space=sflag, size = 0x4, scoped, tag = 'scoped memory for tpu_custom_call.1']
    %11 = vsyncpa [#allocation5], 0
    %12 = vsyncpa [#allocation6], 0
    %13 = vsyncpa [#allocation9], 0
    // Predicated region
    $region2: #{tpu_custom_call.1} parent=1 // pred_check
      _
    $region3: #{tpu_custom_call.1} parent=1 // pred_check_branch
      %15 = sbr.rel (0) target = $region5
    $region4: #{tpu_custom_call.1} parent=1 // pred_region
      %s17 = ssub.s32 128, 128
      %18 = vsyncadd [#allocation5], %s17
      %s20 = sshll.u32 [#allocation4], 4
      %s21 = int_to_ptr.vmem [resolvable:$true] %s20
      %23 = dma.hbm_to_vmem [thread:$0]  %s1, 128, %s21, [#allocation5]
    $region5: #{tpu_custom_call.1} parent=1 // pred_fallthru
      _
    // Predicated region
    $region6: #{tpu_custom_call.1} parent=1 // pred_check
      _
    $region7: #{tpu_custom_call.1} parent=1 // pred_check_branch
      %25 = sbr.rel (0) target = $region9
    $region8: #{tpu_custom_call.1} parent=1 // pred_region
      _
    $region9: #{tpu_custom_call.1} parent=1 // pred_fallthru
      _
    // Predicated region
    $region10: #{tpu_custom_call.1} parent=1 // pred_check
      _
    $region11: #{tpu_custom_call.1} parent=1 // pred_check_branch
      %27 = sbr.rel (0) target = $region13
    $region12: #{tpu_custom_call.1} parent=1 // pred_region
      %28 = dma.done [#allocation5], 128
    $region13: #{tpu_custom_call.1} parent=1 // pred_fallthru
      _
    %v31 = vld [vmem:[#allocation4] sm:$0xff]
    %v32 = vld [vmem:[%s2] sm:$0x3]
    %vm33 = vnez %v32
    %s34 = smul.u32 0, 8
    %s35 = smul.u32 0, 128
    %v36 = vlaneseq
    %v37 = vshrl.u32 %v36, 7
    %v38 = vstv %s34
    %v39 = vadd.s32 %v37, %v38
    %v40 = vlaneseq
    %v41 = vand.u32 %v40, 127
    %v42 = vstv %s35
    %v43 = vadd.s32 %v41, %v42
    %v44 = vmul.u32 %v39, 128
    %v45 = vadd.s32 %v44, %v43
    %s46 = sld [smem:[#allocation3]]
    %s47 = smul.u32 %s46, 2654435761
    %v48 = vstv %s47
    %v49 = vxor.u32 %v45, %v48
    %v50 = vshrl.u32 %v49, 16
    %v51 = vxor.u32 %v49, %v50
    %v52 = vmul.u32 %v51, 2146121005
    %v53 = vshrl.u32 %v52, 15
    %v54 = vxor.u32 %v52, %v53
    %v55 = vmul.u32 %v54, 2221713035
    %v56 = vshrl.u32 %v55, 16
    %v57 = vxor.u32 %v55, %v56
    %vm58 = vcmp.eq.s32.totalorder %v31, 1
    %v59 = vsel %vm33, 16843009, 0
    %v60 = vunpack.c.0.s8 %v59
    %vm61 = vcmp.ne.s32.totalorder %v60, 0
    %vm62 = vmor %vm58, %vm61
    %vm63 = vmxor %vm62, 1
    %vm64 = vcmp.lt.u32.totalorder %v57, 644245094
    %vm65 = vmand %vm64, %vm63
    %vm66 = vcmp.lt.u32.totalorder %v57, 579820585
    %vm67 = vmand %vm66, %vm63
    %vm68 = vcmp.lt.u32.totalorder %v57, 64424509
    %vm69 = vmand %vm68, %vm63
    %v70 = vshrl.u32 %v57, 16
    %v71 = vand.u32 %v57, 65535
    %v72 = vcvt.s32.f32 %v70
    %v73 = vmul.f32 %v72, 65536.0
    %v74 = vcvt.s32.f32 %v71
    %v75 = vadd.f32 %v73, %v74
    %v76 = vmul.f32 %v75, 1.5444433e-05
    %v77 = vmin.f32 %v76, 994.0
    %v78 = vcvt.f32.s32.to.zero.pseudo %v77
    %v79 = vadd.s32 %v78, 5
    %v80 = vsel %vm67, 4, %v31
    %v81 = vsel %vm69, %v79, %v80
    %82 = vst [vmem:[#allocation7] sm:$0xff] %v81
    %v83 = vsel %vm65, %v31, 4294967196
    %84 = vst [vmem:[#allocation8] sm:$0xff] %v83
    // Predicated region
    $region14: #{tpu_custom_call.1} parent=1 // pred_check
      _
    $region15: #{tpu_custom_call.1} parent=1 // pred_check_branch
      %86 = sbr.rel (0) target = $region17
    $region16: #{tpu_custom_call.1} parent=1 // pred_region
      %s88 = ssub.s32 128, 128
      %89 = vsyncadd [#allocation6], %s88
      %s91 = sshll.u32 [#allocation7], 4
      %s92 = int_to_ptr.vmem [resolvable:$true] %s91
      %94 = dma.vmem_to_hbm [thread:$0]  %s92, 128, %s3, [#allocation6]
    $region17: #{tpu_custom_call.1} parent=1 // pred_fallthru
      _
    // Predicated region
    $region18: #{tpu_custom_call.1} parent=1 // pred_check
      _
    $region19: #{tpu_custom_call.1} parent=1 // pred_check_branch
      %96 = sbr.rel (0) target = $region21
    $region20: #{tpu_custom_call.1} parent=1 // pred_region
      %s98 = ssub.s32 128, 128
      %99 = vsyncadd [#allocation9], %s98
      %s101 = sshll.u32 [#allocation8], 4
      %s102 = int_to_ptr.vmem [resolvable:$true] %s101
      %104 = dma.vmem_to_hbm [thread:$0]  %s102, 128, %s4, [#allocation9]
    $region21: #{tpu_custom_call.1} parent=1 // pred_fallthru
      _
    // Predicated region
    $region22: #{tpu_custom_call.1} parent=1 // pred_check
      _
    $region23: #{tpu_custom_call.1} parent=1 // pred_check_branch
      %106 = sbr.rel (0) target = $region25
    $region24: #{tpu_custom_call.1} parent=1 // pred_region
      %107 = dma.done [#allocation6], 128
    $region25: #{tpu_custom_call.1} parent=1 // pred_fallthru
      _
    // Predicated region
    $region26: #{tpu_custom_call.1} parent=1 // pred_check
      _
    $region27: #{tpu_custom_call.1} parent=1 // pred_check_branch
      %109 = sbr.rel (0) target = $region29
    $region28: #{tpu_custom_call.1} parent=1 // pred_region
      %110 = dma.done [#allocation9], 128
    $region29: #{tpu_custom_call.1} parent=1 // pred_fallthru
      _
    %111 = vsyncpa [#allocation5], 1
    %112 = vsyncpa [#allocation6], 1
    %113 = vsyncpa [#allocation9], 1

</llo_original>
